<compile_context>
chip_gen: v5e
topology: v5e:2x2
jax: 0.10.0
libtpu: 0.0.40
codegen_flags: <defaults>
</compile_context>

<pallas_src>
import jax
import jax.numpy as jnp
from jax.experimental import pallas as pl
from jax.experimental.pallas import tpu as pltpu


def fused_mlp_kernel(x_ref, w_ref, b_ref, o_ref):
    # Fused fc[0]+fc[1]: one MXU matmul with f32 accumulate.
    y = jnp.dot(x_ref[...], w_ref[...], preferred_element_type=jnp.float32)
    # Bias (1, O) broadcasts over batch rows; sigmoid epilogue in f32 (EUP exp).
    o_ref[...] = jax.nn.sigmoid(y + b_ref[...]).astype(o_ref.dtype)


def prep_params(w1, b1, w2, b2):
    """One-time parameter prep (NOT on the per-call path).

    w1: (K, H), b1: (H,), w2: (H, O), b2: (O,)  ->  w_fused: (K, O), b_fused: (1, O)
    Exact fusion: the module has no activation between the two Linear layers.
    """
    w_fused = jnp.dot(w1, w2, preferred_element_type=jnp.float32).astype(w1.dtype)
    b_fused = (jnp.dot(b1, w2, preferred_element_type=jnp.float32) + b2).astype(b2.dtype)
    return w_fused, b_fused.reshape(1, -1)


def baseline_network(x, w_fused, b_fused):
    """x: (B, K), w_fused: (K, O), b_fused: (1, O)  ->  (B, O)."""
    B, K = x.shape
    O = w_fused.shape[1]

    # torch's x.detach(): forward is identical, just block gradient flow.
    x = jax.lax.stop_gradient(x)

    vmem_spec = pl.BlockSpec(memory_space=pltpu.MemorySpace.VMEM)

    flops = 2 * B * K * O
    bytes_accessed = 4 * (B * K + K * O + O + B * O)

    return pl.pallas_call(
        fused_mlp_kernel,
        out_shape=jax.ShapeDtypeStruct((B, O), x.dtype),
        in_specs=[vmem_spec, vmem_spec, vmem_spec],
        out_specs=vmem_spec,
        cost_estimate=pl.CostEstimate(
            flops=flops,
            transcendentals=B * O,      # sigmoid -> exp on the EUP
            bytes_accessed=bytes_accessed,
        ),
    )(x, w_fused, b_fused)


def init_linear_params(key, fan_in, fan_out, dtype=jnp.float32):
    # Deterministic init mimicking torch.nn.Linear default: U(-1/sqrt(fan_in), ...)
    kw, kb = jax.random.split(key)
    bound = 1.0 / jnp.sqrt(jnp.asarray(fan_in, dtype=jnp.float32))
    # stored as (in, out), i.e. already transposed relative to torch's (out, in)
    w = jax.random.uniform(kw, (fan_in, fan_out), dtype=dtype, minval=-bound, maxval=bound)
    b = jax.random.uniform(kb, (fan_out,), dtype=dtype, minval=-bound, maxval=bound)
    return w, b


if __name__ == "__main__":
    # Small shapes consistent with the module: Linear(in)->Linear(hidden)->sigmoid
    batch = 8
    input_size = 32
    hidden_size = 256   # module default
    output_size = 8

    key = jax.random.PRNGKey(0)
    kx, k1, k2 = jax.random.split(key, 3)

    x = jax.random.normal(kx, (batch, input_size), dtype=jnp.float32)
    w1, b1 = init_linear_params(k1, input_size, hidden_size)
    w2, b2 = init_linear_params(k2, hidden_size, output_size)

    # One-time parameter fusion (module "init"), off the per-call path.
    w_fused, b_fused = prep_params(w1, b1, w2, b2)
    w_fused, b_fused = jax.block_until_ready((w_fused, b_fused))

    fwd = jax.jit(baseline_network)
    out = fwd(x, w_fused, b_fused)
    out = jax.block_until_ready(out)

    # Pure-JAX references.
    ref_unfused = jax.nn.sigmoid((x @ w1 + b1) @ w2 + b2)           # module semantics
    ref_fused = jax.nn.sigmoid(x @ w_fused + b_fused.reshape(-1))   # same math, fused order

    assert out.shape == (batch, output_size)
    assert jnp.allclose(out, ref_fused, atol=1e-6, rtol=1e-6)
    # Fusion reorders f32 rounding slightly; still well within 1e-4 of the
    # original two-matmul formulation.
    assert jnp.allclose(out, ref_unfused, atol=1e-4, rtol=1e-4)

    print("KERNEL_OK")
</pallas_src>

<mosaic_0001>
module attributes {stable_mosaic.version = 11 : i64} {
  func.func @fused_mlp_kernel(%arg0: memref<8x32xf32, #tpu.memory_space<vmem>>, %arg1: memref<32x8xf32, #tpu.memory_space<vmem>>, %arg2: memref<1x8xf32, #tpu.memory_space<vmem>>, %arg3: memref<8x8xf32, #tpu.memory_space<vmem>>) attributes {dimension_semantics = [], scalar_prefetch = 0 : i64, scratch_operands = 0 : i64, tpu.core_type = #tpu.core_type<tc>} {
    %c0 = arith.constant 0 : index
    %c0_0 = arith.constant 0 : index
    %0 = vector.load %arg0[%c0, %c0_0] : memref<8x32xf32, #tpu.memory_space<vmem>>, vector<8x32xf32>
    %c0_1 = arith.constant 0 : index
    %c0_2 = arith.constant 0 : index
    %1 = vector.load %arg1[%c0_1, %c0_2] : memref<32x8xf32, #tpu.memory_space<vmem>>, vector<32x8xf32>
    %cst = arith.constant dense<0.000000e+00> : vector<8x8xf32>
    %2 = tpu.matmul %0, %1, %cst {dimension_numbers = #tpu.dot_dimension_numbers<[1], [0], [0], [1], [0, 0, 1, 1], [], []>} : vector<8x32xf32>, vector<32x8xf32>, vector<8x8xf32> -> vector<8x8xf32>
    %c0_3 = arith.constant 0 : index
    %c0_4 = arith.constant 0 : index
    %3 = vector.load %arg2[%c0_3, %c0_4] : memref<1x8xf32, #tpu.memory_space<vmem>>, vector<1x8xf32>
    %4 = vector.broadcast %3 : vector<1x8xf32> to vector<8x8xf32>
    %5 = arith.addf %2, %4 : vector<8x8xf32>
    %6 = arith.negf %5 : vector<8x8xf32>
    %7 = math.exp %6 : vector<8x8xf32>
    %cst_5 = arith.constant 1.000000e+00 : f32
    %8 = vector.broadcast %cst_5 : f32 to vector<8x8xf32>
    %9 = arith.addf %8, %7 : vector<8x8xf32>
    %10 = arith.divf %8, %9 : vector<8x8xf32>
    %c0_6 = arith.constant 0 : index
    %c0_7 = arith.constant 0 : index
    %11 = vector.load %arg3[%c0_6, %c0_7] : memref<8x8xf32, #tpu.memory_space<vmem>>, vector<8x8xf32>
    tpu.vector_store %arg3[%c0_6, %c0_7], %10 {strides = array<i32>} : memref<8x8xf32, #tpu.memory_space<vmem>>, vector<8x8xf32>,
    return
  }
}

</mosaic_0001>

<llo_original>
// kernel: baseline_network.1
$region0: #{baseline_network.1}
  #allocation0 [shape = 'u32[]', space=smem, size = 0x4, offset = 0x4, fixed_abs, tag = 'smem constant byte address 0x4 - core index']
  #allocation1 [shape = 'u32[72,128]{1,0:T(1,128)}', space=vmem, size = 0x9000, scoped, tag = 'internal scratch']
  %s0 = inlined_call_operand.vmem [shape: f32[8,32], index: 0, kind: input, shape index: {}]
  %s1 = inlined_call_operand.vmem [shape: f32[32,8], index: 1, kind: input, shape index: {}]
  %s2 = inlined_call_operand.vmem [shape: f32[1,8], index: 2, kind: input, shape index: {}]
  %s3 = inlined_call_operand.hbm [shape: f32[8,8], index: 3, kind: output, shape index: {}]
  %s4 = sld [smem:[#allocation0]]
  $region22: #{baseline_network.1} parent=0
    _
  %s6 = ssub.s32 1, %s4
  %s7 = scalar_select 0, %s6, %s4
  $region1: #{baseline_network.1} parent=0
    #allocation2 [shape = 'u8[4096]{0}', space=vmem, size = 0x1000, scoped, tag = 'output window, operand 0, single buffered']
    #allocation3 [shape = 's32[1]{0}', space=sflag, size = 0x4, scoped, tag = 'scoped memory for baseline_network.1']
    %8 = vsyncpa [#allocation3], 0
    // Predicated region
    $region2: #{baseline_network.1} parent=1 // pred_check
      _
    $region3: #{baseline_network.1} parent=1 // pred_check_branch
      %10 = sbr.rel (0) target = $region5
    $region4: #{baseline_network.1} parent=1 // pred_region
      _
    $region5: #{baseline_network.1} parent=1 // pred_fallthru
      _
    // Predicated region
    $region6: #{baseline_network.1} parent=1 // pred_check
      _
    $region7: #{baseline_network.1} parent=1 // pred_check_branch
      %12 = sbr.rel (0) target = $region9
    $region8: #{baseline_network.1} parent=1 // pred_region
      _
    $region9: #{baseline_network.1} parent=1 // pred_fallthru
      _
    // Predicated region
    $region10: #{baseline_network.1} parent=1 // pred_check
      _
    $region11: #{baseline_network.1} parent=1 // pred_check_branch
      %14 = sbr.rel (0) target = $region13
    $region12: #{baseline_network.1} parent=1 // pred_region
      _
    $region13: #{baseline_network.1} parent=1 // pred_fallthru
      _
    %v15 = vld [vmem:[%s0] sm:$0xff]
    %v16 = vld [vmem:[%s1] sm:$0xff]
    %v17 = vld [vmem:[%s1 + $0x8] sm:$0xff]
    %v18 = vld [vmem:[%s1 + $0x10] sm:$0xff]
    %v19 = vld [vmem:[%s1 + $0x18] sm:$0xff]
    %v20 = vld [vmem:[%s2] sm:$0x1]
    %v22 = vperm.slane %v20, 0
    %vm24 = vcmask 261120
    %v26 = vsel %vm24, %v15, 0
    %28 = vmatpush.msra.mxu0 0.0
    %29 = vmatpush.msra.mxu0 0.0
    %30 = vmatpush.msra.mxu0 0.0
    %31 = vmatpush.msra.mxu0 0.0
    %32 = vmatpush.msra.mxu0 0.0
    %33 = vmatpush.msra.mxu0 0.0
    %34 = vmatpush.msra.mxu0 0.0
    %35 = vmatpush.msra.mxu0 0.0
    %36 = vmatpush.msra.mxu0 0.0
    %37 = vmatpush.msra.mxu0 0.0
    %38 = vmatpush.msra.mxu0 0.0
    %39 = vmatpush.msra.mxu0 0.0
    %40 = vmatpush.msra.mxu0 %v19
    %41 = vmatpush.msra.mxu0 %v18
    %42 = vmatpush.msra.mxu0 %v17
    %43 = vmatpush.msra.mxu0 %v16
    %44 = vmatmul.f32.gmra.mxu0 %v26
    %v45 = vpop.f32.mrf.mxu0
    %v46 = vadd.f32 %v22, %v45
    %47 = vdwg.mxu0
    %v48 = vxor.u32 %v46, 2147483648
    %v49 = vmul.f32 %v48, 1.442695
    %v50 = vpow.pop %v49
    %v51 = vadd.f32 %v50, 1.0
    %v52 = vrcp.pop %v51
    %v53 = vmul.f32 %v51, %v52
    %v54 = vsub.f32 1.0, %v53
    %v55 = vmul.f32 %v52, %v54
    %v56 = vadd.f32 %v52, %v55
    %vm57 = vweird.f32 %v51
    %vm58 = vweird.f32 %v52
    %vm59 = vmor %vm57, %vm58
    %v60 = vsel %vm59, %v52, %v56
    %v61 = vand.u32 2147483647, %v51
    %vm62 = vcmp.eq.f32.partialorder %v61, 8.507059e+37
    %v63 = vand.u32 %v51, 2147483648
    %v64 = vor.u32 1.1754944e-38, %v63
    %v65 = vsel %vm62, %v64, %v60
    %v66 = vmul.f32 1.0, %v65
    %vm67 = vcmask 64512
    %68 = vst.msk [vmem:[#allocation2] sm:$0xff] %vm67, %v66
    // Predicated region
    $region14: #{baseline_network.1} parent=1 // pred_check
      _
    $region15: #{baseline_network.1} parent=1 // pred_check_branch
      %70 = sbr.rel (0) target = $region17
    $region16: #{baseline_network.1} parent=1 // pred_region
      %72 = vsyncadd [#allocation3], 0
      %s74 = sshll.u32 [#allocation2], 4
      %s75 = int_to_ptr.vmem [resolvable:$true] %s74
      %s76 = sshll.u32 %s3, 4
      %s77 = int_to_ptr.hbm [resolvable:$true] %s76
      %79 = dma.vmem_to_hbm [thread:$0]  %s75, 128, %s77, [#allocation3]
    $region17: #{baseline_network.1} parent=1 // pred_fallthru
      _
    // Predicated region
    $region18: #{baseline_network.1} parent=1 // pred_check
      _
    $region19: #{baseline_network.1} parent=1 // pred_check_branch
      %81 = sbr.rel (0) target = $region21
    $region20: #{baseline_network.1} parent=1 // pred_region
      %83 = dma.done [#allocation3], 128
    $region21: #{baseline_network.1} parent=1 // pred_fallthru
      _
    %84 = vsyncpa [#allocation3], 1

</llo_original>
